<compile_context>
chip_gen: v5e
topology: v5e:2x2
jax: 0.10.0
libtpu: 0.0.40
codegen_flags: <defaults>
</compile_context>

<pallas_src>
import functools

import jax
import jax.numpy as jnp
from jax.experimental import pallas as pl
from jax.experimental.pallas import tpu as pltpu


def _round_up(x, m):
    return ((x + m - 1) // m) * m


# ---------------------------------------------------------------------------
# Fused kernel: pooling + cosine contrastive loss + head + BCE partial sums.
# ---------------------------------------------------------------------------
def _fused_kernel(tok0_ref, m0_ref, tok1_ref, m1_ref, us_ref, y0_ref, y1_ref,
                  w_ref, b_ref, part_ref, *, num_rows, num_labels, neg_margin):
    # tok{0,1}_ref: (tb, S, H) token embeddings (native dtype, upcast here)
    # m{0,1}_ref:   (tb, S, 1) attention masks
    # us_ref:       (tb, 1)    utterance-similarity labels
    # y{0,1}_ref:   (tb, Lp)   slot labels (lane-padded to Lp)
    # w_ref:        (H, Lp)    out_proj weight (transposed, lane-padded)
    # b_ref:        (1, Lp)    out_proj bias (lane-padded)
    # part_ref:     (8, 128)   per-tile partial sums: [0,0]=us, [0,1]=bce0, [0,2]=bce1
    tb = tok0_ref.shape[0]
    lp = w_ref.shape[1]

    row = jax.lax.broadcasted_iota(jnp.int32, (tb, 1), 0) + pl.program_id(0) * tb
    valid = row < num_rows                                      # (tb, 1) bool

    def _sum_all(x):  # lane reduce then sublane reduce -> (1, 1)
        return jnp.sum(jnp.sum(x, axis=-1, keepdims=True), axis=0, keepdims=True)

    def _pooled_mean(tok_ref, m_ref):
        tok = tok_ref[...].astype(jnp.float32)                  # (tb, S, H)
        m = m_ref[...].astype(jnp.float32)                      # (tb, S, 1)
        num = jnp.sum(tok * m, axis=1)                          # (tb, H)
        den = jnp.maximum(jnp.sum(m, axis=1), 1e-9)             # (tb, 1)
        mean = num * pl.reciprocal(den)                         # EUP, exact
        # Select (not multiply) so garbage in ragged/pad rows cannot poison sums.
        return jnp.where(valid, mean, 0.0)

    mean0 = _pooled_mean(tok0_ref, m0_ref)
    mean1 = _pooled_mean(tok1_ref, m1_ref)

    # --- utterance-similarity contrastive loss (partial sum over rows) ---
    dot = jnp.sum(mean0 * mean1, axis=-1, keepdims=True)        # (tb, 1)
    n0 = jnp.sqrt(jnp.sum(mean0 * mean0, axis=-1, keepdims=True))
    n1 = jnp.sqrt(jnp.sum(mean1 * mean1, axis=-1, keepdims=True))
    cos = dot * pl.reciprocal(jnp.maximum(n0, 1e-8) * jnp.maximum(n1, 1e-8))
    y = us_ref[...].astype(jnp.float32)
    us_elem = (y * jnp.square(cos - 1.0)
               + (1.0 - y) * jnp.square(jnp.maximum(cos - neg_margin, 0.0)))
    us_part = _sum_all(jnp.where(valid, us_elem, 0.0))          # (1, 1)

    # --- classification head + BCE-with-logits (partial sums) ---
    lane = jax.lax.broadcasted_iota(jnp.int32, (tb, lp), 1)
    elem_mask = valid & (lane < num_labels)                     # (tb, Lp)

    def _bce_partial(mean, t_ref):
        # TODO(synk): for very large hidden sizes add a K grid axis + f32 VMEM
        # accumulator instead of staging the whole (H, Lp) weight per step.
        z = jnp.dot(mean, w_ref[...],
                    preferred_element_type=jnp.float32) + b_ref[...]
        t = t_ref[...].astype(jnp.float32)
        elem = jnp.maximum(z, 0.0) - z * t + jnp.log(1.0 + jnp.exp(-jnp.abs(z)))
        return _sum_all(jnp.where(elem_mask, elem, 0.0))        # (1, 1)

    bce0 = _bce_partial(mean0, y0_ref)
    bce1 = _bce_partial(mean1, y1_ref)

    sub8 = jax.lax.broadcasted_iota(jnp.int32, (8, 128), 0)
    lane8 = jax.lax.broadcasted_iota(jnp.int32, (8, 128), 1)
    part_ref[...] = (jnp.where((sub8 == 0) & (lane8 == 0), us_part, 0.0)
                     + jnp.where((sub8 == 0) & (lane8 == 1), bce0, 0.0)
                     + jnp.where((sub8 == 0) & (lane8 == 2), bce1, 0.0))


# ---------------------------------------------------------------------------
# Tile planning: generation-aware VMEM budget with correct padding accounting.
# ---------------------------------------------------------------------------
def _plan_tiles(Bp, S, H, Lp, tok_itemsize, mask_itemsize):
    try:
        phys = int(pltpu.get_tpu_info().vmem_capacity_bytes)
    except Exception:
        phys = 64 << 20   # conservative fallback = v7x per-core physical VMEM
    budget = min(phys // 2, 48 << 20)
    # Per pair-row VMEM bytes of the double-buffered, row-tiled blocks.
    per_row = 2 * (2 * S * H * tok_itemsize          # tok0 + tok1
                   + 2 * S * 128 * mask_itemsize     # m0 + m1 (last dim pads 1 -> 128)
                   + 128 * 4                         # us labels (1 -> 128 lanes, f32)
                   + 2 * Lp * 4)                     # y0 + y1 (f32)
    fixed = (2 * (_round_up(H, 8) + 8) * Lp * 4      # weight + bias (double-buffered)
             + 2 * 8 * 128 * 4)                      # per-tile partial-sum output block
    tb = max(8, ((budget - fixed) // per_row) // 8 * 8)
    tb = min(tb, 1024)
    # v7x megacore: keep >= 4 'parallel' steps (>= 2 per TensorCore) when possible.
    if Bp >= 32:
        tb = min(tb, max(8, _round_up(pl.cdiv(Bp, 4), 8)))
    elif Bp >= 16:
        tb = min(tb, max(8, _round_up(pl.cdiv(Bp, 2), 8)))
    tb = min(tb, Bp)
    footprint = fixed + per_row * tb
    vmem_limit = int(min(max(32 << 20, footprint + (8 << 20)), phys * 7 // 8))
    return tb, vmem_limit


def _fused_pallas(tok0, m0, tok1, m1, us2d, y0p, y1p, w_t, b2d, *,
                  tb, num_rows, num_labels, neg_margin, vmem_limit):
    Bp, S, H = tok0.shape
    Lp = w_t.shape[1]
    grid = pl.cdiv(Bp, tb)
    kernel = functools.partial(_fused_kernel, num_rows=num_rows,
                               num_labels=num_labels, neg_margin=float(neg_margin))
    return pl.pallas_call(
        kernel,
        out_shape=jax.ShapeDtypeStruct((grid * 8, 128), jnp.float32),
        grid_spec=pltpu.PrefetchScalarGridSpec(
            num_scalar_prefetch=0,
            grid=(grid,),
            in_specs=[
                pl.BlockSpec((tb, S, H), lambda i: (i, 0, 0)),
                pl.BlockSpec((tb, S, 1), lambda i: (i, 0, 0)),
                pl.BlockSpec((tb, S, H), lambda i: (i, 0, 0)),
                pl.BlockSpec((tb, S, 1), lambda i: (i, 0, 0)),
                pl.BlockSpec((tb, 1), lambda i: (i, 0)),
                pl.BlockSpec((tb, Lp), lambda i: (i, 0)),
                pl.BlockSpec((tb, Lp), lambda i: (i, 0)),
                pl.BlockSpec((H, Lp), lambda i: (0, 0)),
                pl.BlockSpec((1, Lp), lambda i: (0, 0)),
            ],
            out_specs=pl.BlockSpec((8, 128), lambda i: (i, 0)),
        ),
        compiler_params=pltpu.CompilerParams(
            dimension_semantics=("parallel",),
            vmem_limit_bytes=vmem_limit),
    )(tok0, m0, tok1, m1, us2d, y0p, y1p, w_t, b2d)


# ---------------------------------------------------------------------------
# Wrapper: full module forward (post base_model).
# ---------------------------------------------------------------------------
def prepare_head_params(weight, bias):
    """One-time (cacheable) prep: transpose + lane-pad out_proj to Lp=128k (f32)."""
    L, H = weight.shape
    Lp = _round_up(max(L, 1), 128)
    w_t = jnp.zeros((H, Lp), jnp.float32).at[:, :L].set(weight.T.astype(jnp.float32))
    b2d = jnp.zeros((1, Lp), jnp.float32).at[:, :L].set(
        bias.reshape(1, L).astype(jnp.float32))
    return w_t, b2d


def joint_forward(token_emb_0, attn_mask_0, token_emb_1, attn_mask_1,
                  us_labels, smc_labels, smc_labels_2,
                  out_proj_weight, out_proj_bias, *,
                  us_loss_weight=0.5, smc_loss_weight=0.5,
                  us_negative_to_positive_rate=3, negative_margin=-1.0):
    B, S, H = token_emb_0.shape
    L = out_proj_weight.shape[0]
    w_t, b2d = prepare_head_params(out_proj_weight, out_proj_bias)
    Lp = w_t.shape[1]

    tok_dt = token_emb_0.dtype
    # Small side inputs (masks / labels) are reshaped / lane-padded / cast in
    # the wrapper (negligible traffic); the big token tensors are passed
    # straight through in their native dtype (no concat / astype / copy).
    m0 = attn_mask_0.astype(tok_dt)[:, :, None]
    m1 = attn_mask_1.astype(tok_dt)[:, :, None]
    us2d = us_labels.reshape(B, 1).astype(jnp.float32)
    y0p = jnp.zeros((B, Lp), jnp.float32).at[:, :L].set(smc_labels.astype(jnp.float32))
    y1p = jnp.zeros((B, Lp), jnp.float32).at[:, :L].set(smc_labels_2.astype(jnp.float32))

    tok0, tok1 = token_emb_0, token_emb_1
    Bp = _round_up(B, 8)
    if Bp != B:
        # At most 7 pad rows (a no-op for typical batch sizes that are
        # multiples of 8); pad rows are also masked out inside the kernel.
        pad = Bp - B
        tok0 = jnp.pad(tok0, ((0, pad), (0, 0), (0, 0)))
        tok1 = jnp.pad(tok1, ((0, pad), (0, 0), (0, 0)))
        m0 = jnp.pad(m0, ((0, pad), (0, 0), (0, 0)))
        m1 = jnp.pad(m1, ((0, pad), (0, 0), (0, 0)))
        us2d = jnp.pad(us2d, ((0, pad), (0, 0)))
        y0p = jnp.pad(y0p, ((0, pad), (0, 0)))
        y1p = jnp.pad(y1p, ((0, pad), (0, 0)))

    tb, vmem_limit = _plan_tiles(
        Bp, S, H, Lp,
        tok_itemsize=jnp.dtype(tok_dt).itemsize,
        mask_itemsize=jnp.dtype(tok_dt).itemsize)

    parts = _fused_pallas(tok0, m0, tok1, m1, us2d, y0p, y1p, w_t, b2d,
                          tb=tb, num_rows=B, num_labels=L,
                          neg_margin=negative_margin, vmem_limit=vmem_limit)

    # Trivial finalization of the per-tile partial sums.
    parts = parts.reshape(-1, 8, 128)
    us_sum = jnp.sum(parts[:, 0, 0])
    bce0_sum = jnp.sum(parts[:, 0, 1])
    bce1_sum = jnp.sum(parts[:, 0, 2])

    rate = float(us_negative_to_positive_rate)
    us_loss = us_sum / B
    smc_loss = (bce0_sum * (1.0 / (2.0 + rate))
                + bce1_sum * ((1.0 + rate) / (2.0 + rate))) / (B * L)
    total_loss = us_loss_weight * us_loss + smc_loss_weight * smc_loss
    return (total_loss,)


# ---------------------------------------------------------------------------
# Pure-JAX reference (mirrors the PyTorch module) for validation.
# ---------------------------------------------------------------------------
def _ref_total_loss(te0, am0, te1, am1, us, y0, y1, w, b, *,
                    us_w=0.5, smc_w=0.5, rate=3, neg_margin=-1.0):
    def pool(te, am):
        m = am.astype(jnp.float32)[:, :, None]
        return jnp.sum(te * m, axis=1) / jnp.maximum(jnp.sum(m, axis=1), 1e-9)

    m0, m1 = pool(te0, am0), pool(te1, am1)
    n0 = jnp.sqrt(jnp.sum(m0 * m0, axis=-1))
    n1 = jnp.sqrt(jnp.sum(m1 * m1, axis=-1))
    cos = jnp.sum(m0 * m1, axis=-1) / (jnp.maximum(n0, 1e-8) * jnp.maximum(n1, 1e-8))
    us_loss = jnp.mean(us * jnp.square(cos - 1.0)
                       + (1.0 - us) * jnp.square(jnp.maximum(cos - neg_margin, 0.0)))
    hp = jax.lax.Precision.HIGHEST
    z0 = jnp.dot(m0, w.T, precision=hp) + b
    z1 = jnp.dot(m1, w.T, precision=hp) + b

    def bce(z, t):
        return jnp.mean(jnp.maximum(z, 0.0) - z * t + jnp.log(1.0 + jnp.exp(-jnp.abs(z))))

    smc = bce(z0, y0) * (1.0 / (2.0 + rate)) + bce(z1, y1) * ((1.0 + rate) / (2.0 + rate))
    return us_loss * us_w + smc * smc_w


if __name__ == "__main__":
    B, S, H, L = 2, 8, 32, 5  # batch(pairs), seq, hidden_size, smc_num_labels

    key = jax.random.PRNGKey(0)
    k0, k1, kw, kl0, kl1 = jax.random.split(key, 5)

    token_emb_0 = jax.random.normal(k0, (B, S, H), dtype=jnp.float32)
    token_emb_1 = jax.random.normal(k1, (B, S, H), dtype=jnp.float32)

    pos = jnp.arange(S)[None, :]
    attn_mask_0 = (pos < jnp.array([[S], [5]])).astype(jnp.float32)
    attn_mask_1 = (pos < jnp.array([[6], [S]])).astype(jnp.float32)

    us_labels = jnp.array([1.0, 0.0], dtype=jnp.float32)
    smc_labels = (jax.random.uniform(kl0, (B, L)) < 0.5).astype(jnp.float32)
    smc_labels_2 = (jax.random.uniform(kl1, (B, L)) < 0.5).astype(jnp.float32)

    # out_proj init matching the module: weight ~ N(0, 0.02), bias = 0.
    out_proj_weight = 0.02 * jax.random.normal(kw, (L, H), dtype=jnp.float32)
    out_proj_bias = jnp.zeros((L,), dtype=jnp.float32)

    fwd = jax.jit(joint_forward)
    (total_loss,) = fwd(token_emb_0, attn_mask_0, token_emb_1, attn_mask_1,
                        us_labels, smc_labels, smc_labels_2,
                        out_proj_weight, out_proj_bias)
    jax.block_until_ready(total_loss)

    ref = _ref_total_loss(token_emb_0, attn_mask_0, token_emb_1, attn_mask_1,
                          us_labels, smc_labels, smc_labels_2,
                          out_proj_weight, out_proj_bias)

    assert total_loss.shape == ()
    assert jnp.allclose(total_loss, ref, atol=2e-5, rtol=1e-4), (total_loss, ref)
    print("KERNEL_OK")
</pallas_src>

<mosaic_0001>
module attributes {stable_mosaic.version = 11 : i64} {
  func.func @_fused_kernel(%arg0: i32, %arg1: memref<8x8x32xf32, #tpu.memory_space<vmem>>, %arg2: memref<8x8x1xf32, #tpu.memory_space<vmem>>, %arg3: memref<8x8x32xf32, #tpu.memory_space<vmem>>, %arg4: memref<8x8x1xf32, #tpu.memory_space<vmem>>, %arg5: memref<8x1xf32, #tpu.memory_space<vmem>>, %arg6: memref<8x128xf32, #tpu.memory_space<vmem>>, %arg7: memref<8x128xf32, #tpu.memory_space<vmem>>, %arg8: memref<32x128xf32, #tpu.memory_space<vmem>>, %arg9: memref<1x128xf32, #tpu.memory_space<vmem>>, %arg10: memref<8x128xf32, #tpu.memory_space<vmem>>) attributes {dimension_semantics = [#tpu.dimension_semantics<parallel>], iteration_bounds = array<i64: 1>, scalar_prefetch = 0 : i64, scratch_operands = 0 : i64, tpu.core_type = #tpu.core_type<tc>, window_params = [{transform_indices = @transform_0, window_bounds = array<i64: 8, 8, 32>}, {transform_indices = @transform_1, window_bounds = array<i64: 8, 8, 1>}, {transform_indices = @transform_2, window_bounds = array<i64: 8, 8, 32>}, {transform_indices = @transform_3, window_bounds = array<i64: 8, 8, 1>}, {transform_indices = @transform_4, window_bounds = array<i64: 8, 1>}, {transform_indices = @transform_5, window_bounds = array<i64: 8, 128>}, {transform_indices = @transform_6, window_bounds = array<i64: 8, 128>}, {pipeline_mode = #tpu.pipeline_mode<synchronous>, transform_indices = @transform_7, window_bounds = array<i64: 32, 128>}, {pipeline_mode = #tpu.pipeline_mode<synchronous>, transform_indices = @transform_8, window_bounds = array<i64: 1, 128>}, {transform_indices = @transform_9, window_bounds = array<i64: 8, 128>}]} {
    %0 = tpu.iota {dimensions = array<i32: 0>} : vector<8x1xi32>
    %c8_i32 = arith.constant 8 : i32
    %1 = arith.muli %arg0, %c8_i32 : i32
    %2 = vector.broadcast %1 : i32 to vector<8x1xi32>
    %3 = arith.addi %0, %2 : vector<8x1xi32>
    %c2_i32 = arith.constant 2 : i32
    %4 = vector.broadcast %c2_i32 : i32 to vector<8x1xi32>
    %5 = arith.cmpi slt, %3, %4 : vector<8x1xi32>
    %c0 = arith.constant 0 : index
    %c0_0 = arith.constant 0 : index
    %c0_1 = arith.constant 0 : index
    %6 = vector.load %arg1[%c0, %c0_0, %c0_1] : memref<8x8x32xf32, #tpu.memory_space<vmem>>, vector<8x8x32xf32>
    %c0_2 = arith.constant 0 : index
    %c0_3 = arith.constant 0 : index
    %c0_4 = arith.constant 0 : index
    %7 = vector.load %arg2[%c0_2, %c0_3, %c0_4] : memref<8x8x1xf32, #tpu.memory_space<vmem>>, vector<8x8x1xf32>
    %8 = vector.broadcast %7 : vector<8x8x1xf32> to vector<8x8x32xf32>
    %9 = arith.mulf %6, %8 : vector<8x8x32xf32>
    %cst = arith.constant dense<0.000000e+00> : vector<8x32xf32>
    %10 = vector.multi_reduction <add>, %9, %cst [1] : vector<8x8x32xf32> to vector<8x32xf32>
    %cst_5 = arith.constant dense<0.000000e+00> : vector<8x1xf32>
    %11 = vector.multi_reduction <add>, %7, %cst_5 [1] : vector<8x8x1xf32> to vector<8x1xf32>
    %cst_6 = arith.constant 9.99999971E-10 : f32
    %12 = vector.broadcast %cst_6 : f32 to vector<8x1xf32>
    %13 = arith.maximumf %11, %12 : vector<8x1xf32>
    %14 = tpu.reciprocal %13 : vector<8x1xf32> -> vector<8x1xf32>
    %15 = vector.broadcast %14 : vector<8x1xf32> to vector<8x32xf32>
    %16 = arith.mulf %10, %15 : vector<8x32xf32>
    %cst_7 = arith.constant 0.000000e+00 : f32
    %17 = vector.shape_cast %5 : vector<8x1xi1> to vector<8x1xi1>
    %18 = vector.broadcast %17 : vector<8x1xi1> to vector<8x32xi1>
    %19 = vector.broadcast %cst_7 : f32 to vector<8x32xf32>
    %20 = arith.select %18, %16, %19 : vector<8x32xi1>, vector<8x32xf32>
    %c0_8 = arith.constant 0 : index
    %c0_9 = arith.constant 0 : index
    %c0_10 = arith.constant 0 : index
    %21 = vector.load %arg3[%c0_8, %c0_9, %c0_10] : memref<8x8x32xf32, #tpu.memory_space<vmem>>, vector<8x8x32xf32>
    %c0_11 = arith.constant 0 : index
    %c0_12 = arith.constant 0 : index
    %c0_13 = arith.constant 0 : index
    %22 = vector.load %arg4[%c0_11, %c0_12, %c0_13] : memref<8x8x1xf32, #tpu.memory_space<vmem>>, vector<8x8x1xf32>
    %23 = vector.broadcast %22 : vector<8x8x1xf32> to vector<8x8x32xf32>
    %24 = arith.mulf %21, %23 : vector<8x8x32xf32>
    %cst_14 = arith.constant dense<0.000000e+00> : vector<8x32xf32>
    %25 = vector.multi_reduction <add>, %24, %cst_14 [1] : vector<8x8x32xf32> to vector<8x32xf32>
    %cst_15 = arith.constant dense<0.000000e+00> : vector<8x1xf32>
    %26 = vector.multi_reduction <add>, %22, %cst_15 [1] : vector<8x8x1xf32> to vector<8x1xf32>
    %cst_16 = arith.constant 9.99999971E-10 : f32
    %27 = vector.broadcast %cst_16 : f32 to vector<8x1xf32>
    %28 = arith.maximumf %26, %27 : vector<8x1xf32>
    %29 = tpu.reciprocal %28 : vector<8x1xf32> -> vector<8x1xf32>
    %30 = vector.broadcast %29 : vector<8x1xf32> to vector<8x32xf32>
    %31 = arith.mulf %25, %30 : vector<8x32xf32>
    %cst_17 = arith.constant 0.000000e+00 : f32
    %32 = vector.shape_cast %5 : vector<8x1xi1> to vector<8x1xi1>
    %33 = vector.broadcast %32 : vector<8x1xi1> to vector<8x32xi1>
    %34 = vector.broadcast %cst_17 : f32 to vector<8x32xf32>
    %35 = arith.select %33, %31, %34 : vector<8x32xi1>, vector<8x32xf32>
    %36 = arith.mulf %20, %35 : vector<8x32xf32>
    %cst_18 = arith.constant dense<0.000000e+00> : vector<8xf32>
    %37 = vector.multi_reduction <add>, %36, %cst_18 [1] : vector<8x32xf32> to vector<8xf32>
    %38 = vector.shape_cast %37 : vector<8xf32> to vector<8x1xf32>
    %39 = arith.mulf %20, %20 : vector<8x32xf32>
    %cst_19 = arith.constant dense<0.000000e+00> : vector<8xf32>
    %40 = vector.multi_reduction <add>, %39, %cst_19 [1] : vector<8x32xf32> to vector<8xf32>
    %41 = vector.shape_cast %40 : vector<8xf32> to vector<8x1xf32>
    %42 = math.sqrt %41 : vector<8x1xf32>
    %43 = arith.mulf %35, %35 : vector<8x32xf32>
    %cst_20 = arith.constant dense<0.000000e+00> : vector<8xf32>
    %44 = vector.multi_reduction <add>, %43, %cst_20 [1] : vector<8x32xf32> to vector<8xf32>
    %45 = vector.shape_cast %44 : vector<8xf32> to vector<8x1xf32>
    %46 = math.sqrt %45 : vector<8x1xf32>
    %cst_21 = arith.constant 9.99999993E-9 : f32
    %47 = vector.broadcast %cst_21 : f32 to vector<8x1xf32>
    %48 = arith.maximumf %42, %47 : vector<8x1xf32>
    %cst_22 = arith.constant 9.99999993E-9 : f32
    %49 = vector.broadcast %cst_22 : f32 to vector<8x1xf32>
    %50 = arith.maximumf %46, %49 : vector<8x1xf32>
    %51 = arith.mulf %48, %50 : vector<8x1xf32>
    %52 = tpu.reciprocal %51 : vector<8x1xf32> -> vector<8x1xf32>
    %53 = arith.mulf %38, %52 : vector<8x1xf32>
    %c0_23 = arith.constant 0 : index
    %c0_24 = arith.constant 0 : index
    %54 = vector.load %arg5[%c0_23, %c0_24] : memref<8x1xf32, #tpu.memory_space<vmem>>, vector<8x1xf32>
    %cst_25 = arith.constant 1.000000e+00 : f32
    %55 = vector.broadcast %cst_25 : f32 to vector<8x1xf32>
    %56 = arith.subf %53, %55 : vector<8x1xf32>
    %57 = arith.mulf %56, %56 : vector<8x1xf32>
    %58 = arith.mulf %54, %57 : vector<8x1xf32>
    %cst_26 = arith.constant 1.000000e+00 : f32
    %59 = vector.broadcast %cst_26 : f32 to vector<8x1xf32>
    %60 = arith.subf %59, %54 : vector<8x1xf32>
    %cst_27 = arith.constant -1.000000e+00 : f32
    %61 = vector.broadcast %cst_27 : f32 to vector<8x1xf32>
    %62 = arith.subf %53, %61 : vector<8x1xf32>
    %cst_28 = arith.constant 0.000000e+00 : f32
    %63 = vector.broadcast %cst_28 : f32 to vector<8x1xf32>
    %64 = arith.maximumf %62, %63 : vector<8x1xf32>
    %65 = arith.mulf %64, %64 : vector<8x1xf32>
    %66 = arith.mulf %60, %65 : vector<8x1xf32>
    %67 = arith.addf %58, %66 : vector<8x1xf32>
    %cst_29 = arith.constant 0.000000e+00 : f32
    %68 = vector.broadcast %cst_29 : f32 to vector<8x1xf32>
    %69 = arith.select %5, %67, %68 : vector<8x1xi1>, vector<8x1xf32>
    %cst_30 = arith.constant dense<0.000000e+00> : vector<8xf32>
    %70 = vector.multi_reduction <add>, %69, %cst_30 [1] : vector<8x1xf32> to vector<8xf32>
    %71 = vector.shape_cast %70 : vector<8xf32> to vector<8x1xf32>
    %cst_31 = arith.constant dense<0.000000e+00> : vector<1xf32>
    %72 = vector.multi_reduction <add>, %71, %cst_31 [0] : vector<8x1xf32> to vector<1xf32>
    %73 = vector.shape_cast %72 : vector<1xf32> to vector<1x1xf32>
    %74 = tpu.iota {dimensions = array<i32: 1>} : vector<8x128xi32>
    %c5_i32 = arith.constant 5 : i32
    %75 = vector.broadcast %c5_i32 : i32 to vector<8x128xi32>
    %76 = arith.cmpi slt, %74, %75 : vector<8x128xi32>
    %77 = vector.broadcast %5 : vector<8x1xi1> to vector<8x128xi1>
    %78 = arith.andi %77, %76 : vector<8x128xi1>
    %c0_32 = arith.constant 0 : index
    %c0_33 = arith.constant 0 : index
    %79 = vector.load %arg8[%c0_32, %c0_33] : memref<32x128xf32, #tpu.memory_space<vmem>>, vector<32x128xf32>
    %cst_34 = arith.constant dense<0.000000e+00> : vector<8x128xf32>
    %80 = tpu.matmul %20, %79, %cst_34 {dimension_numbers = #tpu.dot_dimension_numbers<[1], [0], [0], [1], [0, 0, 1, 1], [], []>} : vector<8x32xf32>, vector<32x128xf32>, vector<8x128xf32> -> vector<8x128xf32>
    %c0_35 = arith.constant 0 : index
    %c0_36 = arith.constant 0 : index
    %81 = vector.load %arg9[%c0_35, %c0_36] : memref<1x128xf32, #tpu.memory_space<vmem>>, vector<1x128xf32>
    %82 = vector.broadcast %81 : vector<1x128xf32> to vector<8x128xf32>
    %83 = arith.addf %80, %82 : vector<8x128xf32>
    %c0_37 = arith.constant 0 : index
    %c0_38 = arith.constant 0 : index
    %84 = vector.load %arg6[%c0_37, %c0_38] : memref<8x128xf32, #tpu.memory_space<vmem>>, vector<8x128xf32>
    %cst_39 = arith.constant 0.000000e+00 : f32
    %85 = vector.broadcast %cst_39 : f32 to vector<8x128xf32>
    %86 = arith.maximumf %83, %85 : vector<8x128xf32>
    %87 = arith.mulf %83, %84 : vector<8x128xf32>
    %88 = arith.subf %86, %87 : vector<8x128xf32>
    %89 = math.absf %83 : vector<8x128xf32>
    %cst_40 = arith.constant 0.000000e+00 : f32
    %90 = vector.broadcast %cst_40 : f32 to vector<8x128xf32>
    %91 = arith.subf %90, %89 : vector<8x128xf32>
    %92 = math.exp %91 : vector<8x128xf32>
    %cst_41 = arith.constant 1.000000e+00 : f32
    %93 = vector.broadcast %cst_41 : f32 to vector<8x128xf32>
    %94 = arith.addf %93, %92 : vector<8x128xf32>
    %95 = math.log %94 : vector<8x128xf32>
    %96 = arith.addf %88, %95 : vector<8x128xf32>
    %cst_42 = arith.constant 0.000000e+00 : f32
    %97 = vector.broadcast %cst_42 : f32 to vector<8x128xf32>
    %98 = arith.select %78, %96, %97 : vector<8x128xi1>, vector<8x128xf32>
    %cst_43 = arith.constant dense<0.000000e+00> : vector<8xf32>
    %99 = vector.multi_reduction <add>, %98, %cst_43 [1] : vector<8x128xf32> to vector<8xf32>
    %100 = vector.shape_cast %99 : vector<8xf32> to vector<8x1xf32>
    %cst_44 = arith.constant dense<0.000000e+00> : vector<1xf32>
    %101 = vector.multi_reduction <add>, %100, %cst_44 [0] : vector<8x1xf32> to vector<1xf32>
    %102 = vector.shape_cast %101 : vector<1xf32> to vector<1x1xf32>
    %c0_45 = arith.constant 0 : index
    %c0_46 = arith.constant 0 : index
    %103 = vector.load %arg8[%c0_45, %c0_46] : memref<32x128xf32, #tpu.memory_space<vmem>>, vector<32x128xf32>
    %cst_47 = arith.constant dense<0.000000e+00> : vector<8x128xf32>
    %104 = tpu.matmul %35, %103, %cst_47 {dimension_numbers = #tpu.dot_dimension_numbers<[1], [0], [0], [1], [0, 0, 1, 1], [], []>} : vector<8x32xf32>, vector<32x128xf32>, vector<8x128xf32> -> vector<8x128xf32>
    %c0_48 = arith.constant 0 : index
    %c0_49 = arith.constant 0 : index
    %105 = vector.load %arg9[%c0_48, %c0_49] : memref<1x128xf32, #tpu.memory_space<vmem>>, vector<1x128xf32>
    %106 = vector.broadcast %105 : vector<1x128xf32> to vector<8x128xf32>
    %107 = arith.addf %104, %106 : vector<8x128xf32>
    %c0_50 = arith.constant 0 : index
    %c0_51 = arith.constant 0 : index
    %108 = vector.load %arg7[%c0_50, %c0_51] : memref<8x128xf32, #tpu.memory_space<vmem>>, vector<8x128xf32>
    %cst_52 = arith.constant 0.000000e+00 : f32
    %109 = vector.broadcast %cst_52 : f32 to vector<8x128xf32>
    %110 = arith.maximumf %107, %109 : vector<8x128xf32>
    %111 = arith.mulf %107, %108 : vector<8x128xf32>
    %112 = arith.subf %110, %111 : vector<8x128xf32>
    %113 = math.absf %107 : vector<8x128xf32>
    %cst_53 = arith.constant 0.000000e+00 : f32
    %114 = vector.broadcast %cst_53 : f32 to vector<8x128xf32>
    %115 = arith.subf %114, %113 : vector<8x128xf32>
    %116 = math.exp %115 : vector<8x128xf32>
    %cst_54 = arith.constant 1.000000e+00 : f32
    %117 = vector.broadcast %cst_54 : f32 to vector<8x128xf32>
    %118 = arith.addf %117, %116 : vector<8x128xf32>
    %119 = math.log %118 : vector<8x128xf32>
    %120 = arith.addf %112, %119 : vector<8x128xf32>
    %cst_55 = arith.constant 0.000000e+00 : f32
    %121 = vector.broadcast %cst_55 : f32 to vector<8x128xf32>
    %122 = arith.select %78, %120, %121 : vector<8x128xi1>, vector<8x128xf32>
    %cst_56 = arith.constant dense<0.000000e+00> : vector<8xf32>
    %123 = vector.multi_reduction <add>, %122, %cst_56 [1] : vector<8x128xf32> to vector<8xf32>
    %124 = vector.shape_cast %123 : vector<8xf32> to vector<8x1xf32>
    %cst_57 = arith.constant dense<0.000000e+00> : vector<1xf32>
    %125 = vector.multi_reduction <add>, %124, %cst_57 [0] : vector<8x1xf32> to vector<1xf32>
    %126 = vector.shape_cast %125 : vector<1xf32> to vector<1x1xf32>
    %127 = tpu.iota {dimensions = array<i32: 0>} : vector<8x128xi32>
    %128 = tpu.iota {dimensions = array<i32: 1>} : vector<8x128xi32>
    %c0_i32 = arith.constant 0 : i32
    %129 = vector.broadcast %c0_i32 : i32 to vector<8x128xi32>
    %130 = arith.cmpi eq, %127, %129 : vector<8x128xi32>
    %c0_i32_58 = arith.constant 0 : i32
    %131 = vector.broadcast %c0_i32_58 : i32 to vector<8x128xi32>
    %132 = arith.cmpi eq, %128, %131 : vector<8x128xi32>
    %133 = arith.andi %130, %132 : vector<8x128xi1>
    %cst_59 = arith.constant 0.000000e+00 : f32
    %134 = vector.shape_cast %73 : vector<1x1xf32> to vector<1x1xf32>
    %135 = vector.broadcast %134 : vector<1x1xf32> to vector<8x128xf32>
    %136 = vector.broadcast %cst_59 : f32 to vector<8x128xf32>
    %137 = arith.select %133, %135, %136 : vector<8x128xi1>, vector<8x128xf32>
    %c0_i32_60 = arith.constant 0 : i32
    %138 = vector.broadcast %c0_i32_60 : i32 to vector<8x128xi32>
    %139 = arith.cmpi eq, %127, %138 : vector<8x128xi32>
    %c1_i32 = arith.constant 1 : i32
    %140 = vector.broadcast %c1_i32 : i32 to vector<8x128xi32>
    %141 = arith.cmpi eq, %128, %140 : vector<8x128xi32>
    %142 = arith.andi %139, %141 : vector<8x128xi1>
    %cst_61 = arith.constant 0.000000e+00 : f32
    %143 = vector.shape_cast %102 : vector<1x1xf32> to vector<1x1xf32>
    %144 = vector.broadcast %143 : vector<1x1xf32> to vector<8x128xf32>
    %145 = vector.broadcast %cst_61 : f32 to vector<8x128xf32>
    %146 = arith.select %142, %144, %145 : vector<8x128xi1>, vector<8x128xf32>
    %147 = arith.addf %137, %146 : vector<8x128xf32>
    %c0_i32_62 = arith.constant 0 : i32
    %148 = vector.broadcast %c0_i32_62 : i32 to vector<8x128xi32>
    %149 = arith.cmpi eq, %127, %148 : vector<8x128xi32>
    %c2_i32_63 = arith.constant 2 : i32
    %150 = vector.broadcast %c2_i32_63 : i32 to vector<8x128xi32>
    %151 = arith.cmpi eq, %128, %150 : vector<8x128xi32>
    %152 = arith.andi %149, %151 : vector<8x128xi1>
    %cst_64 = arith.constant 0.000000e+00 : f32
    %153 = vector.shape_cast %126 : vector<1x1xf32> to vector<1x1xf32>
    %154 = vector.broadcast %153 : vector<1x1xf32> to vector<8x128xf32>
    %155 = vector.broadcast %cst_64 : f32 to vector<8x128xf32>
    %156 = arith.select %152, %154, %155 : vector<8x128xi1>, vector<8x128xf32>
    %157 = arith.addf %147, %156 : vector<8x128xf32>
    %c0_65 = arith.constant 0 : index
    %c0_66 = arith.constant 0 : index
    %158 = vector.load %arg10[%c0_65, %c0_66] : memref<8x128xf32, #tpu.memory_space<vmem>>, vector<8x128xf32>
    tpu.vector_store %arg10[%c0_65, %c0_66], %157 {strides = array<i32>} : memref<8x128xf32, #tpu.memory_space<vmem>>, vector<8x128xf32>,
    return
  }
  func.func @transform_0(%arg0: i32) -> (i32, i32, i32) {
    %c0_i32 = arith.constant 0 : i32
    %c0_i32_0 = arith.constant 0 : i32
    %c0_i32_1 = arith.constant 0 : i32
    return %arg0, %c0_i32, %c0_i32_0 : i32, i32, i32
  }
  func.func @transform_1(%arg0: i32) -> (i32, i32, i32) {
    %c0_i32 = arith.constant 0 : i32
    %c0_i32_0 = arith.constant 0 : i32
    %c0_i32_1 = arith.constant 0 : i32
    return %arg0, %c0_i32, %c0_i32_0 : i32, i32, i32
  }
  func.func @transform_2(%arg0: i32) -> (i32, i32, i32) {
    %c0_i32 = arith.constant 0 : i32
    %c0_i32_0 = arith.constant 0 : i32
    %c0_i32_1 = arith.constant 0 : i32
    return %arg0, %c0_i32, %c0_i32_0 : i32, i32, i32
  }
  func.func @transform_3(%arg0: i32) -> (i32, i32, i32) {
    %c0_i32 = arith.constant 0 : i32
    %c0_i32_0 = arith.constant 0 : i32
    %c0_i32_1 = arith.constant 0 : i32
    return %arg0, %c0_i32, %c0_i32_0 : i32, i32, i32
  }
  func.func @transform_4(%arg0: i32) -> (i32, i32) {
    %c0_i32 = arith.constant 0 : i32
    %c0_i32_0 = arith.constant 0 : i32
    return %arg0, %c0_i32 : i32, i32
  }
  func.func @transform_5(%arg0: i32) -> (i32, i32) {
    %c0_i32 = arith.constant 0 : i32
    %c0_i32_0 = arith.constant 0 : i32
    return %arg0, %c0_i32 : i32, i32
  }
  func.func @transform_6(%arg0: i32) -> (i32, i32) {
    %c0_i32 = arith.constant 0 : i32
    %c0_i32_0 = arith.constant 0 : i32
    return %arg0, %c0_i32 : i32, i32
  }
  func.func @transform_7(%arg0: i32) -> (i32, i32) {
    %c0_i32 = arith.constant 0 : i32
    %c0_i32_0 = arith.constant 0 : i32
    %c0_i32_1 = arith.constant 0 : i32
    return %c0_i32, %c0_i32_0 : i32, i32
  }
  func.func @transform_8(%arg0: i32) -> (i32, i32) {
    %c0_i32 = arith.constant 0 : i32
    %c0_i32_0 = arith.constant 0 : i32
    %c0_i32_1 = arith.constant 0 : i32
    return %c0_i32, %c0_i32_0 : i32, i32
  }
  func.func @transform_9(%arg0: i32) -> (i32, i32) {
    %c0_i32 = arith.constant 0 : i32
    %c0_i32_0 = arith.constant 0 : i32
    return %arg0, %c0_i32 : i32, i32
  }
}

</mosaic_0001>

<llo_original>
// kernel: joint_forward.1
$region0: #{joint_forward.1}
  #allocation0 [shape = 'u32[]', space=smem, size = 0x4, offset = 0x4, fixed_abs, tag = 'smem constant byte address 0x4 - core index']
  #allocation1 [shape = 'u32[72,128]{1,0:T(1,128)}', space=vmem, size = 0x9000, scoped, tag = 'internal scratch']
  %s0 = inlined_call_operand.vmem [shape: f32[8,8,32], index: 0, kind: input, shape index: {}]
  %s1 = inlined_call_operand.vmem [shape: f32[8,8,1], index: 1, kind: input, shape index: {}]
  %s2 = inlined_call_operand.vmem [shape: f32[8,8,32], index: 2, kind: input, shape index: {}]
  %s3 = inlined_call_operand.vmem [shape: f32[8,8,1], index: 3, kind: input, shape index: {}]
  %s4 = inlined_call_operand.vmem [shape: f32[8,1], index: 4, kind: input, shape index: {}]
  %s5 = inlined_call_operand.vmem [shape: f32[8,128], index: 5, kind: input, shape index: {}]
  %s6 = inlined_call_operand.vmem [shape: f32[8,128], index: 6, kind: input, shape index: {}]
  %s7 = inlined_call_operand.vmem [shape: f32[32,128], index: 7, kind: input, shape index: {}]
  %s8 = inlined_call_operand.vmem [shape: f32[1,128], index: 8, kind: input, shape index: {}]
  %s9 = inlined_call_operand.vmem [shape: f32[8,128], index: 9, kind: output, shape index: {}]
  %s10 = sld [smem:[#allocation0]]
  $region46: #{joint_forward.1} parent=0
    _
  %s12 = ssub.s32 1, %s10
  %s13 = scalar_select 0, %s12, %s10
  // Predicated region
  $region2: #{joint_forward.1} parent=0 // pred_check
    _
  $region3: #{joint_forward.1} parent=0 // pred_check_branch
    %15 = sbr.rel (0) target = $region5
  $region4: #{joint_forward.1} parent=0 // pred_region
    _
  $region5: #{joint_forward.1} parent=0 // pred_fallthru
    _
  // Predicated region
  $region6: #{joint_forward.1} parent=0 // pred_check
    _
  $region7: #{joint_forward.1} parent=0 // pred_check_branch
    %17 = sbr.rel (0) target = $region9
  $region8: #{joint_forward.1} parent=0 // pred_region
    _
  $region9: #{joint_forward.1} parent=0 // pred_fallthru
    _
  // Predicated region
  $region10: #{joint_forward.1} parent=0 // pred_check
    _
  $region11: #{joint_forward.1} parent=0 // pred_check_branch
    %19 = sbr.rel (0) target = $region13
  $region12: #{joint_forward.1} parent=0 // pred_region
    _
  $region13: #{joint_forward.1} parent=0 // pred_fallthru
    _
  // Predicated region
  $region14: #{joint_forward.1} parent=0 // pred_check
    _
  $region15: #{joint_forward.1} parent=0 // pred_check_branch
    %21 = sbr.rel (0) target = $region17
  $region16: #{joint_forward.1} parent=0 // pred_region
    _
  $region17: #{joint_forward.1} parent=0 // pred_fallthru
    _
  // Predicated region
  $region18: #{joint_forward.1} parent=0 // pred_check
    _
  $region19: #{joint_forward.1} parent=0 // pred_check_branch
    %23 = sbr.rel (0) target = $region21
  $region20: #{joint_forward.1} parent=0 // pred_region
    _
  $region21: #{joint_forward.1} parent=0 // pred_fallthru
    _
  // Predicated region
  $region22: #{joint_forward.1} parent=0 // pred_check
    _
  $region23: #{joint_forward.1} parent=0 // pred_check_branch
    %25 = sbr.rel (0) target = $region25
  $region24: #{joint_forward.1} parent=0 // pred_region
    _
  $region25: #{joint_forward.1} parent=0 // pred_fallthru
    _
  // Predicated region
  $region26: #{joint_forward.1} parent=0 // pred_check
    _
  $region27: #{joint_forward.1} parent=0 // pred_check_branch
    %27 = sbr.rel (0) target = $region29
  $region28: #{joint_forward.1} parent=0 // pred_region
    _
  $region29: #{joint_forward.1} parent=0 // pred_fallthru
    _
  // Predicated region
  $region30: #{joint_forward.1} parent=0 // pred_check
    _
  $region31: #{joint_forward.1} parent=0 // pred_check_branch
    %29 = sbr.rel (0) target = $region33
  $region32: #{joint_forward.1} parent=0 // pred_region
    _
  $region33: #{joint_forward.1} parent=0 // pred_fallthru
    _
  // Predicated region
  $region34: #{joint_forward.1} parent=0 // pred_check
    _
  $region35: #{joint_forward.1} parent=0 // pred_check_branch
    %31 = sbr.rel (0) target = $region37
  $region36: #{joint_forward.1} parent=0 // pred_region
    _
  $region37: #{joint_forward.1} parent=0 // pred_fallthru
    _
  %v32 = vlaneseq
  %v33 = vshrl.u32 %v32, 7
  %s34 = smul.u32 0, 8
  %v35 = vstv %s34
  %v36 = vadd.s32 %v33, %v35
  %vm37 = vcmp.lt.s32.totalorder %v36, 2
  %v38 = vld [vmem:[%s0] sm:$0xff]
  %v39 = vld [vmem:[%s0 + $0x8] sm:$0xff]
  %v40 = vld [vmem:[%s0 + $0x10] sm:$0xff]
  %v41 = vld [vmem:[%s0 + $0x18] sm:$0xff]
  %v42 = vld [vmem:[%s0 + $0x20] sm:$0xff]
  %v43 = vld [vmem:[%s0 + $0x28] sm:$0xff]
  %v44 = vld [vmem:[%s0 + $0x30] sm:$0xff]
  %v45 = vld [vmem:[%s0 + $0x38] sm:$0xff]
  %v46 = vld [vmem:[%s1] sm:$0xff]
  %v47 = vld [vmem:[%s1 + $0x8] sm:$0xff]
  %v48 = vld [vmem:[%s1 + $0x10] sm:$0xff]
  %v49 = vld [vmem:[%s1 + $0x18] sm:$0xff]
  %v50 = vld [vmem:[%s1 + $0x20] sm:$0xff]
  %v51 = vld [vmem:[%s1 + $0x28] sm:$0xff]
  %v52 = vld [vmem:[%s1 + $0x30] sm:$0xff]
  %v53 = vld [vmem:[%s1 + $0x38] sm:$0xff]
  %55 = vset.pattern.permute.xlu0 0
  %56 = vperm.xlu0 %55, %v46
  %v57 = vpop.permute.xlu0 %56
  %60 = vset.pattern.permute.xlu0 0
  %61 = vperm.xlu0 %60, %v47
  %v62 = vpop.permute.xlu0 %61
  %65 = vset.pattern.permute.xlu0 0
  %66 = vperm.xlu0 %65, %v48
  %v67 = vpop.permute.xlu0 %66
  %70 = vset.pattern.permute.xlu0 0
  %71 = vperm.xlu0 %70, %v49
  %v72 = vpop.permute.xlu0 %71
  %75 = vset.pattern.permute.xlu0 0
  %76 = vperm.xlu0 %75, %v50
  %v77 = vpop.permute.xlu0 %76
  %80 = vset.pattern.permute.xlu0 0
  %81 = vperm.xlu0 %80, %v51
  %v82 = vpop.permute.xlu0 %81
  %85 = vset.pattern.permute.xlu0 0
  %86 = vperm.xlu0 %85, %v52
  %v87 = vpop.permute.xlu0 %86
  %90 = vset.pattern.permute.xlu0 0
  %91 = vperm.xlu0 %90, %v53
  %v92 = vpop.permute.xlu0 %91
  %v94 = vmul.f32 %v38, %v57
  %v95 = vmul.f32 %v39, %v62
  %v96 = vmul.f32 %v40, %v67
  %v97 = vmul.f32 %v41, %v72
  %v98 = vmul.f32 %v42, %v77
  %v99 = vmul.f32 %v43, %v82
  %v100 = vmul.f32 %v44, %v87
  %v101 = vmul.f32 %v45, %v92
  %vm102 = vcmask 261120
  %v103 = vsel %vm102, %v94, 0.0
  %v104 = vrot.slane %v103, 4
  %v105 = vadd.f32 %v103, %v104
  %v106 = vrot.slane %v105, 2
  %v107 = vadd.f32 %v105, %v106
  %v108 = vrot.slane %v107, 1
  %v109 = vadd.f32 %v107, %v108
  %v110 = vsel %vm102, %v95, 0.0
  %v111 = vrot.slane %v110, 4
  %v112 = vadd.f32 %v110, %v111
  %v113 = vrot.slane %v112, 2
  %v114 = vadd.f32 %v112, %v113
  %v115 = vrot.slane %v114, 1
  %v116 = vadd.f32 %v114, %v115
  %v117 = vsel %vm102, %v96, 0.0
  %v118 = vrot.slane %v117, 4
  %v119 = vadd.f32 %v117, %v118
  %v120 = vrot.slane %v119, 2
  %v121 = vadd.f32 %v119, %v120
  %v122 = vrot.slane %v121, 1
  %v123 = vadd.f32 %v121, %v122
  %v124 = vsel %vm102, %v97, 0.0
  %v125 = vrot.slane %v124, 4
  %v126 = vadd.f32 %v124, %v125
  %v127 = vrot.slane %v126, 2
  %v128 = vadd.f32 %v126, %v127
  %v129 = vrot.slane %v128, 1
  %v130 = vadd.f32 %v128, %v129
  %v131 = vsel %vm102, %v98, 0.0
  %v132 = vrot.slane %v131, 4
  %v133 = vadd.f32 %v131, %v132
  %v134 = vrot.slane %v133, 2
  %v135 = vadd.f32 %v133, %v134
  %v136 = vrot.slane %v135, 1
  %v137 = vadd.f32 %v135, %v136
  %v138 = vsel %vm102, %v99, 0.0
  %v139 = vrot.slane %v138, 4
  %v140 = vadd.f32 %v138, %v139
  %v141 = vrot.slane %v140, 2
  %v142 = vadd.f32 %v140, %v141
  %v143 = vrot.slane %v142, 1
  %v144 = vadd.f32 %v142, %v143
  %v145 = vsel %vm102, %v100, 0.0
  %v146 = vrot.slane %v145, 4
  %v147 = vadd.f32 %v145, %v146
  %v148 = vrot.slane %v147, 2
  %v149 = vadd.f32 %v147, %v148
  %v150 = vrot.slane %v149, 1
  %v151 = vadd.f32 %v149, %v150
  %v152 = vsel %vm102, %v101, 0.0
  %v153 = vrot.slane %v152, 4
  %v154 = vadd.f32 %v152, %v153
  %v155 = vrot.slane %v154, 2
  %v156 = vadd.f32 %v154, %v155
  %v157 = vrot.slane %v156, 1
  %v158 = vadd.f32 %v156, %v157
  %vm159 = vcmask 7168
  %v160 = vsel %vm159, %v46, 0.0
  %v161 = vrot.slane %v160, 4
  %v162 = vadd.f32 %v160, %v161
  %v163 = vrot.slane %v162, 2
  %v164 = vadd.f32 %v162, %v163
  %v165 = vrot.slane %v164, 1
  %v166 = vadd.f32 %v164, %v165
  %v167 = vsel %vm159, %v47, 0.0
  %v168 = vrot.slane %v167, 4
  %v169 = vadd.f32 %v167, %v168
  %v170 = vrot.slane %v169, 2
  %v171 = vadd.f32 %v169, %v170
  %v172 = vrot.slane %v171, 1
  %v173 = vadd.f32 %v171, %v172
  %v174 = vsel %vm159, %v48, 0.0
  %v175 = vrot.slane %v174, 4
  %v176 = vadd.f32 %v174, %v175
  %v177 = vrot.slane %v176, 2
  %v178 = vadd.f32 %v176, %v177
  %v179 = vrot.slane %v178, 1
  %v180 = vadd.f32 %v178, %v179
  %v181 = vsel %vm159, %v49, 0.0
  %v182 = vrot.slane %v181, 4
  %v183 = vadd.f32 %v181, %v182
  %v184 = vrot.slane %v183, 2
  %v185 = vadd.f32 %v183, %v184
  %v186 = vrot.slane %v185, 1
  %v187 = vadd.f32 %v185, %v186
  %v188 = vsel %vm159, %v50, 0.0
  %v189 = vrot.slane %v188, 4
  %v190 = vadd.f32 %v188, %v189
  %v191 = vrot.slane %v190, 2
  %v192 = vadd.f32 %v190, %v191
  %v193 = vrot.slane %v192, 1
  %v194 = vadd.f32 %v192, %v193
  %v195 = vsel %vm159, %v51, 0.0
  %v196 = vrot.slane %v195, 4
  %v197 = vadd.f32 %v195, %v196
  %v198 = vrot.slane %v197, 2
  %v199 = vadd.f32 %v197, %v198
  %v200 = vrot.slane %v199, 1
  %v201 = vadd.f32 %v199, %v200
  %v202 = vsel %vm159, %v52, 0.0
  %v203 = vrot.slane %v202, 4
  %v204 = vadd.f32 %v202, %v203
  %v205 = vrot.slane %v204, 2
  %v206 = vadd.f32 %v204, %v205
  %v207 = vrot.slane %v206, 1
  %v208 = vadd.f32 %v206, %v207
  %v209 = vsel %vm159, %v53, 0.0
  %v210 = vrot.slane %v209, 4
  %v211 = vadd.f32 %v209, %v210
  %v212 = vrot.slane %v211, 2
  %v213 = vadd.f32 %v211, %v212
  %v214 = vrot.slane %v213, 1
  %v215 = vadd.f32 %v213, %v214
  %v216 = vmax.f32 %v166, 1e-09
  %v217 = vmax.f32 %v173, 1e-09
  %v218 = vmax.f32 %v180, 1e-09
  %v219 = vmax.f32 %v187, 1e-09
  %v220 = vmax.f32 %v194, 1e-09
  %v221 = vmax.f32 %v201, 1e-09
  %v222 = vmax.f32 %v208, 1e-09
  %v223 = vmax.f32 %v215, 1e-09
  %v224 = vrcp.pop %v216
  %v225 = vmul.f32 %v216, %v224
  %v226 = vsub.f32 1.0, %v225
  %v227 = vmul.f32 %v224, %v226
  %v228 = vadd.f32 %v224, %v227
  %vm229 = vweird.f32 %v216
  %vm230 = vweird.f32 %v224
  %vm231 = vmor %vm229, %vm230
  %v232 = vsel %vm231, %v224, %v228
  %v233 = vand.u32 2147483647, %v216
  %vm234 = vcmp.eq.f32.partialorder %v233, 8.507059e+37
  %v235 = vand.u32 %v216, 2147483648
  %v236 = vor.u32 1.1754944e-38, %v235
  %v237 = vsel %vm234, %v236, %v232
  %v238 = vrcp.pop %v217
  %v239 = vmul.f32 %v217, %v238
  %v240 = vsub.f32 1.0, %v239
  %v241 = vmul.f32 %v238, %v240
  %v242 = vadd.f32 %v238, %v241
  %vm243 = vweird.f32 %v217
  %vm244 = vweird.f32 %v238
  %vm245 = vmor %vm243, %vm244
  %v246 = vsel %vm245, %v238, %v242
  %v247 = vand.u32 2147483647, %v217
  %vm248 = vcmp.eq.f32.partialorder %v247, 8.507059e+37
  %v249 = vand.u32 %v217, 2147483648
  %v250 = vor.u32 1.1754944e-38, %v249
  %v251 = vsel %vm248, %v250, %v246
  %v252 = vrcp.pop %v218
  %v253 = vmul.f32 %v218, %v252
  %v254 = vsub.f32 1.0, %v253
  %v255 = vmul.f32 %v252, %v254
  %v256 = vadd.f32 %v252, %v255
  %vm257 = vweird.f32 %v218
  %vm258 = vweird.f32 %v252
  %vm259 = vmor %vm257, %vm258
  %v260 = vsel %vm259, %v252, %v256
  %v261 = vand.u32 2147483647, %v218
  %vm262 = vcmp.eq.f32.partialorder %v261, 8.507059e+37
  %v263 = vand.u32 %v218, 2147483648
  %v264 = vor.u32 1.1754944e-38, %v263
  %v265 = vsel %vm262, %v264, %v260
  %v266 = vrcp.pop %v219
  %v267 = vmul.f32 %v219, %v266
  %v268 = vsub.f32 1.0, %v267
  %v269 = vmul.f32 %v266, %v268
  %v270 = vadd.f32 %v266, %v269
  %vm271 = vweird.f32 %v219
  %vm272 = vweird.f32 %v266
  %vm273 = vmor %vm271, %vm272
  %v274 = vsel %vm273, %v266, %v270
  %v275 = vand.u32 2147483647, %v219
  %vm276 = vcmp.eq.f32.partialorder %v275, 8.507059e+37
  %v277 = vand.u32 %v219, 2147483648
  %v278 = vor.u32 1.1754944e-38, %v277
  %v279 = vsel %vm276, %v278, %v274
  %v280 = vrcp.pop %v220
  %v281 = vmul.f32 %v220, %v280
  %v282 = vsub.f32 1.0, %v281
  %v283 = vmul.f32 %v280, %v282
  %v284 = vadd.f32 %v280, %v283
  %vm285 = vweird.f32 %v220
  %vm286 = vweird.f32 %v280
  %vm287 = vmor %vm285, %vm286
  %v288 = vsel %vm287, %v280, %v284
  %v289 = vand.u32 2147483647, %v220
  %vm290 = vcmp.eq.f32.partialorder %v289, 8.507059e+37
  %v291 = vand.u32 %v220, 2147483648
  %v292 = vor.u32 1.1754944e-38, %v291
  %v293 = vsel %vm290, %v292, %v288
  %v294 = vrcp.pop %v221
  %v295 = vmul.f32 %v221, %v294
  %v296 = vsub.f32 1.0, %v295
  %v297 = vmul.f32 %v294, %v296
  %v298 = vadd.f32 %v294, %v297
  %vm299 = vweird.f32 %v221
  %vm300 = vweird.f32 %v294
  %vm301 = vmor %vm299, %vm300
  %v302 = vsel %vm301, %v294, %v298
  %v303 = vand.u32 2147483647, %v221
  %vm304 = vcmp.eq.f32.partialorder %v303, 8.507059e+37
  %v305 = vand.u32 %v221, 2147483648
  %v306 = vor.u32 1.1754944e-38, %v305
  %v307 = vsel %vm304, %v306, %v302
  %v308 = vrcp.pop %v222
  %v309 = vmul.f32 %v222, %v308
  %v310 = vsub.f32 1.0, %v309
  %v311 = vmul.f32 %v308, %v310
  %v312 = vadd.f32 %v308, %v311
  %vm313 = vweird.f32 %v222
  %vm314 = vweird.f32 %v308
  %vm315 = vmor %vm313, %vm314
  %v316 = vsel %vm315, %v308, %v312
  %v317 = vand.u32 2147483647, %v222
  %vm318 = vcmp.eq.f32.partialorder %v317, 8.507059e+37
  %v319 = vand.u32 %v222, 2147483648
  %v320 = vor.u32 1.1754944e-38, %v319
  %v321 = vsel %vm318, %v320, %v316
  %v322 = vrcp.pop %v223
  %v323 = vmul.f32 %v223, %v322
  %v324 = vsub.f32 1.0, %v323
  %v325 = vmul.f32 %v322, %v324
  %v326 = vadd.f32 %v322, %v325
  %vm327 = vweird.f32 %v223
  %vm328 = vweird.f32 %v322
  %vm329 = vmor %vm327, %vm328
  %v330 = vsel %vm329, %v322, %v326
  %v331 = vand.u32 2147483647, %v223
  %vm332 = vcmp.eq.f32.partialorder %v331, 8.507059e+37
  %v333 = vand.u32 %v223, 2147483648
  %v334 = vor.u32 1.1754944e-38, %v333
  %v335 = vsel %vm332, %v334, %v330
  %337 = vset.pattern.permute.xlu0 0
  %338 = vperm.xlu0 %337, %v237
  %v339 = vpop.permute.xlu0 %338
  %342 = vset.pattern.permute.xlu0 0
  %343 = vperm.xlu0 %342, %v251
  %v344 = vpop.permute.xlu0 %343
  %347 = vset.pattern.permute.xlu0 0
  %348 = vperm.xlu0 %347, %v265
  %v349 = vpop.permute.xlu0 %348
  %352 = vset.pattern.permute.xlu0 0
  %353 = vperm.xlu0 %352, %v279
  %v354 = vpop.permute.xlu0 %353
  %357 = vset.pattern.permute.xlu0 0
  %358 = vperm.xlu0 %357, %v293
  %v359 = vpop.permute.xlu0 %358
  %362 = vset.pattern.permute.xlu0 0
  %363 = vperm.xlu0 %362, %v307
  %v364 = vpop.permute.xlu0 %363
  %367 = vset.pattern.permute.xlu0 0
  %368 = vperm.xlu0 %367, %v321
  %v369 = vpop.permute.xlu0 %368
  %372 = vset.pattern.permute.xlu0 0
  %373 = vperm.xlu0 %372, %v335
  %v374 = vpop.permute.xlu0 %373
  %v376 = vmul.f32 %v109, %v339
  %v377 = vmul.f32 %v116, %v344
  %v378 = vmul.f32 %v123, %v349
  %v379 = vmul.f32 %v130, %v354
  %v380 = vmul.f32 %v137, %v359
  %v381 = vmul.f32 %v144, %v364
  %v382 = vmul.f32 %v151, %v369
  %v383 = vmul.f32 %v158, %v374
  %v384 = vsel %vm37, 1, 0
  %vm385 = vcmp.eq.s32.totalorder %v384, 1
  %vm394 = vcmask 1041409
  %v395 = vsel %vm394, %v377, %v376
  %vm396 = vcmask 1042434
  %v397 = vsel %vm396, %v378, %v395
  %vm398 = vcmask 1043459
  %v399 = vsel %vm398, %v379, %v397
  %vm400 = vcmask 1044484
  %v401 = vsel %vm400, %v380, %v399
  %vm402 = vcmask 1045509
  %v403 = vsel %vm402, %v381, %v401
  %vm404 = vcmask 1046534
  %v405 = vsel %vm404, %v382, %v403
  %vm406 = vcmask 1047559
  %v407 = vsel %vm406, %v383, %v405
  %v409 = vsel %vm385, %v407, 0.0
  %v410 = vld [vmem:[%s2] sm:$0xff]
  %v411 = vld [vmem:[%s2 + $0x8] sm:$0xff]
  %v412 = vld [vmem:[%s2 + $0x10] sm:$0xff]
  %v413 = vld [vmem:[%s2 + $0x18] sm:$0xff]
  %v414 = vld [vmem:[%s2 + $0x20] sm:$0xff]
  %v415 = vld [vmem:[%s2 + $0x28] sm:$0xff]
  %v416 = vld [vmem:[%s2 + $0x30] sm:$0xff]
  %v417 = vld [vmem:[%s2 + $0x38] sm:$0xff]
  %v418 = vld [vmem:[%s3] sm:$0xff]
  %v419 = vld [vmem:[%s3 + $0x8] sm:$0xff]
  %v420 = vld [vmem:[%s3 + $0x10] sm:$0xff]
  %v421 = vld [vmem:[%s3 + $0x18] sm:$0xff]
  %v422 = vld [vmem:[%s3 + $0x20] sm:$0xff]
  %v423 = vld [vmem:[%s3 + $0x28] sm:$0xff]
  %v424 = vld [vmem:[%s3 + $0x30] sm:$0xff]
  %v425 = vld [vmem:[%s3 + $0x38] sm:$0xff]
  %427 = vset.pattern.permute.xlu0 0
  %428 = vperm.xlu0 %427, %v418
  %v429 = vpop.permute.xlu0 %428
  %432 = vset.pattern.permute.xlu0 0
  %433 = vperm.xlu0 %432, %v419
  %v434 = vpop.permute.xlu0 %433
  %437 = vset.pattern.permute.xlu0 0
  %438 = vperm.xlu0 %437, %v420
  %v439 = vpop.permute.xlu0 %438
  %442 = vset.pattern.permute.xlu0 0
  %443 = vperm.xlu0 %442, %v421
  %v444 = vpop.permute.xlu0 %443
  %447 = vset.pattern.permute.xlu0 0
  %448 = vperm.xlu0 %447, %v422
  %v449 = vpop.permute.xlu0 %448
  %452 = vset.pattern.permute.xlu0 0
  %453 = vperm.xlu0 %452, %v423
  %v454 = vpop.permute.xlu0 %453
  %457 = vset.pattern.permute.xlu0 0
  %458 = vperm.xlu0 %457, %v424
  %v459 = vpop.permute.xlu0 %458
  %462 = vset.pattern.permute.xlu0 0
  %463 = vperm.xlu0 %462, %v425
  %v464 = vpop.permute.xlu0 %463
  %v466 = vmul.f32 %v410, %v429
  %v467 = vmul.f32 %v411, %v434
  %v468 = vmul.f32 %v412, %v439
  %v469 = vmul.f32 %v413, %v444
  %v470 = vmul.f32 %v414, %v449
  %v471 = vmul.f32 %v415, %v454
  %v472 = vmul.f32 %v416, %v459
  %v473 = vmul.f32 %v417, %v464
  %v474 = vsel %vm102, %v466, 0.0
  %v475 = vrot.slane %v474, 4
  %v476 = vadd.f32 %v474, %v475
  %v477 = vrot.slane %v476, 2
  %v478 = vadd.f32 %v476, %v477
  %v479 = vrot.slane %v478, 1
  %v480 = vadd.f32 %v478, %v479
  %v481 = vsel %vm102, %v467, 0.0
  %v482 = vrot.slane %v481, 4
  %v483 = vadd.f32 %v481, %v482
  %v484 = vrot.slane %v483, 2
  %v485 = vadd.f32 %v483, %v484
  %v486 = vrot.slane %v485, 1
  %v487 = vadd.f32 %v485, %v486
  %v488 = vsel %vm102, %v468, 0.0
  %v489 = vrot.slane %v488, 4
  %v490 = vadd.f32 %v488, %v489
  %v491 = vrot.slane %v490, 2
  %v492 = vadd.f32 %v490, %v491
  %v493 = vrot.slane %v492, 1
  %v494 = vadd.f32 %v492, %v493
  %v495 = vsel %vm102, %v469, 0.0
  %v496 = vrot.slane %v495, 4
  %v497 = vadd.f32 %v495, %v496
  %v498 = vrot.slane %v497, 2
  %v499 = vadd.f32 %v497, %v498
  %v500 = vrot.slane %v499, 1
  %v501 = vadd.f32 %v499, %v500
  %v502 = vsel %vm102, %v470, 0.0
  %v503 = vrot.slane %v502, 4
  %v504 = vadd.f32 %v502, %v503
  %v505 = vrot.slane %v504, 2
  %v506 = vadd.f32 %v504, %v505
  %v507 = vrot.slane %v506, 1
  %v508 = vadd.f32 %v506, %v507
  %v509 = vsel %vm102, %v471, 0.0
  %v510 = vrot.slane %v509, 4
  %v511 = vadd.f32 %v509, %v510
  %v512 = vrot.slane %v511, 2
  %v513 = vadd.f32 %v511, %v512
  %v514 = vrot.slane %v513, 1
  %v515 = vadd.f32 %v513, %v514
  %v516 = vsel %vm102, %v472, 0.0
  %v517 = vrot.slane %v516, 4
  %v518 = vadd.f32 %v516, %v517
  %v519 = vrot.slane %v518, 2
  %v520 = vadd.f32 %v518, %v519
  %v521 = vrot.slane %v520, 1
  %v522 = vadd.f32 %v520, %v521
  %v523 = vsel %vm102, %v473, 0.0
  %v524 = vrot.slane %v523, 4
  %v525 = vadd.f32 %v523, %v524
  %v526 = vrot.slane %v525, 2
  %v527 = vadd.f32 %v525, %v526
  %v528 = vrot.slane %v527, 1
  %v529 = vadd.f32 %v527, %v528
  %v530 = vsel %vm159, %v418, 0.0
  %v531 = vrot.slane %v530, 4
  %v532 = vadd.f32 %v530, %v531
  %v533 = vrot.slane %v532, 2
  %v534 = vadd.f32 %v532, %v533
  %v535 = vrot.slane %v534, 1
  %v536 = vadd.f32 %v534, %v535
  %v537 = vsel %vm159, %v419, 0.0
  %v538 = vrot.slane %v537, 4
  %v539 = vadd.f32 %v537, %v538
  %v540 = vrot.slane %v539, 2
  %v541 = vadd.f32 %v539, %v540
  %v542 = vrot.slane %v541, 1
  %v543 = vadd.f32 %v541, %v542
  %v544 = vsel %vm159, %v420, 0.0
  %v545 = vrot.slane %v544, 4
  %v546 = vadd.f32 %v544, %v545
  %v547 = vrot.slane %v546, 2
  %v548 = vadd.f32 %v546, %v547
  %v549 = vrot.slane %v548, 1
  %v550 = vadd.f32 %v548, %v549
  %v551 = vsel %vm159, %v421, 0.0
  %v552 = vrot.slane %v551, 4
  %v553 = vadd.f32 %v551, %v552
  %v554 = vrot.slane %v553, 2
  %v555 = vadd.f32 %v553, %v554
  %v556 = vrot.slane %v555, 1
  %v557 = vadd.f32 %v555, %v556
  %v558 = vsel %vm159, %v422, 0.0
  %v559 = vrot.slane %v558, 4
  %v560 = vadd.f32 %v558, %v559
  %v561 = vrot.slane %v560, 2
  %v562 = vadd.f32 %v560, %v561
  %v563 = vrot.slane %v562, 1
  %v564 = vadd.f32 %v562, %v563
  %v565 = vsel %vm159, %v423, 0.0
  %v566 = vrot.slane %v565, 4
  %v567 = vadd.f32 %v565, %v566
  %v568 = vrot.slane %v567, 2
  %v569 = vadd.f32 %v567, %v568
  %v570 = vrot.slane %v569, 1
  %v571 = vadd.f32 %v569, %v570
  %v572 = vsel %vm159, %v424, 0.0
  %v573 = vrot.slane %v572, 4
  %v574 = vadd.f32 %v572, %v573
  %v575 = vrot.slane %v574, 2
  %v576 = vadd.f32 %v574, %v575
  %v577 = vrot.slane %v576, 1
  %v578 = vadd.f32 %v576, %v577
  %v579 = vsel %vm159, %v425, 0.0
  %v580 = vrot.slane %v579, 4
  %v581 = vadd.f32 %v579, %v580
  %v582 = vrot.slane %v581, 2
  %v583 = vadd.f32 %v581, %v582
  %v584 = vrot.slane %v583, 1
  %v585 = vadd.f32 %v583, %v584
  %v586 = vmax.f32 %v536, 1e-09
  %v587 = vmax.f32 %v543, 1e-09
  %v588 = vmax.f32 %v550, 1e-09
  %v589 = vmax.f32 %v557, 1e-09
  %v590 = vmax.f32 %v564, 1e-09
  %v591 = vmax.f32 %v571, 1e-09
  %v592 = vmax.f32 %v578, 1e-09
  %v593 = vmax.f32 %v585, 1e-09
  %v594 = vrcp.pop %v586
  %v595 = vmul.f32 %v586, %v594
  %v596 = vsub.f32 1.0, %v595
  %v597 = vmul.f32 %v594, %v596
  %v598 = vadd.f32 %v594, %v597
  %vm599 = vweird.f32 %v586
  %vm600 = vweird.f32 %v594
  %vm601 = vmor %vm599, %vm600
  %v602 = vsel %vm601, %v594, %v598
  %v603 = vand.u32 2147483647, %v586
  %vm604 = vcmp.eq.f32.partialorder %v603, 8.507059e+37
  %v605 = vand.u32 %v586, 2147483648
  %v606 = vor.u32 1.1754944e-38, %v605
  %v607 = vsel %vm604, %v606, %v602
  %v608 = vrcp.pop %v587
  %v609 = vmul.f32 %v587, %v608
  %v610 = vsub.f32 1.0, %v609
  %v611 = vmul.f32 %v608, %v610
  %v612 = vadd.f32 %v608, %v611
  %vm613 = vweird.f32 %v587
  %vm614 = vweird.f32 %v608
  %vm615 = vmor %vm613, %vm614
  %v616 = vsel %vm615, %v608, %v612
  %v617 = vand.u32 2147483647, %v587
  %vm618 = vcmp.eq.f32.partialorder %v617, 8.507059e+37
  %v619 = vand.u32 %v587, 2147483648
  %v620 = vor.u32 1.1754944e-38, %v619
  %v621 = vsel %vm618, %v620, %v616
  %v622 = vrcp.pop %v588
  %v623 = vmul.f32 %v588, %v622
  %v624 = vsub.f32 1.0, %v623
  %v625 = vmul.f32 %v622, %v624
  %v626 = vadd.f32 %v622, %v625
  %vm627 = vweird.f32 %v588
  %vm628 = vweird.f32 %v622
  %vm629 = vmor %vm627, %vm628
  %v630 = vsel %vm629, %v622, %v626
  %v631 = vand.u32 2147483647, %v588
  %vm632 = vcmp.eq.f32.partialorder %v631, 8.507059e+37
  %v633 = vand.u32 %v588, 2147483648
  %v634 = vor.u32 1.1754944e-38, %v633
  %v635 = vsel %vm632, %v634, %v630
  %v636 = vrcp.pop %v589
  %v637 = vmul.f32 %v589, %v636
  %v638 = vsub.f32 1.0, %v637
  %v639 = vmul.f32 %v636, %v638
  %v640 = vadd.f32 %v636, %v639
  %vm641 = vweird.f32 %v589
  %vm642 = vweird.f32 %v636
  %vm643 = vmor %vm641, %vm642
  %v644 = vsel %vm643, %v636, %v640
  %v645 = vand.u32 2147483647, %v589
  %vm646 = vcmp.eq.f32.partialorder %v645, 8.507059e+37
  %v647 = vand.u32 %v589, 2147483648
  %v648 = vor.u32 1.1754944e-38, %v647
  %v649 = vsel %vm646, %v648, %v644
  %v650 = vrcp.pop %v590
  %v651 = vmul.f32 %v590, %v650
  %v652 = vsub.f32 1.0, %v651
  %v653 = vmul.f32 %v650, %v652
  %v654 = vadd.f32 %v650, %v653
  %vm655 = vweird.f32 %v590
  %vm656 = vweird.f32 %v650
  %vm657 = vmor %vm655, %vm656
  %v658 = vsel %vm657, %v650, %v654
  %v659 = vand.u32 2147483647, %v590
  %vm660 = vcmp.eq.f32.partialorder %v659, 8.507059e+37
  %v661 = vand.u32 %v590, 2147483648
  %v662 = vor.u32 1.1754944e-38, %v661
  %v663 = vsel %vm660, %v662, %v658
  %v664 = vrcp.pop %v591
  %v665 = vmul.f32 %v591, %v664
  %v666 = vsub.f32 1.0, %v665
  %v667 = vmul.f32 %v664, %v666
  %v668 = vadd.f32 %v664, %v667
  %vm669 = vweird.f32 %v591
  %vm670 = vweird.f32 %v664
  %vm671 = vmor %vm669, %vm670
  %v672 = vsel %vm671, %v664, %v668
  %v673 = vand.u32 2147483647, %v591
  %vm674 = vcmp.eq.f32.partialorder %v673, 8.507059e+37
  %v675 = vand.u32 %v591, 2147483648
  %v676 = vor.u32 1.1754944e-38, %v675
  %v677 = vsel %vm674, %v676, %v672
  %v678 = vrcp.pop %v592
  %v679 = vmul.f32 %v592, %v678
  %v680 = vsub.f32 1.0, %v679
  %v681 = vmul.f32 %v678, %v680
  %v682 = vadd.f32 %v678, %v681
  %vm683 = vweird.f32 %v592
  %vm684 = vweird.f32 %v678
  %vm685 = vmor %vm683, %vm684
  %v686 = vsel %vm685, %v678, %v682
  %v687 = vand.u32 2147483647, %v592
  %vm688 = vcmp.eq.f32.partialorder %v687, 8.507059e+37
  %v689 = vand.u32 %v592, 2147483648
  %v690 = vor.u32 1.1754944e-38, %v689
  %v691 = vsel %vm688, %v690, %v686
  %v692 = vrcp.pop %v593
  %v693 = vmul.f32 %v593, %v692
  %v694 = vsub.f32 1.0, %v693
  %v695 = vmul.f32 %v692, %v694
  %v696 = vadd.f32 %v692, %v695
  %vm697 = vweird.f32 %v593
  %vm698 = vweird.f32 %v692
  %vm699 = vmor %vm697, %vm698
  %v700 = vsel %vm699, %v692, %v696
  %v701 = vand.u32 2147483647, %v593
  %vm702 = vcmp.eq.f32.partialorder %v701, 8.507059e+37
  %v703 = vand.u32 %v593, 2147483648
  %v704 = vor.u32 1.1754944e-38, %v703
  %v705 = vsel %vm702, %v704, %v700
  %707 = vset.pattern.permute.xlu0 0
  %708 = vperm.xlu0 %707, %v607
  %v709 = vpop.permute.xlu0 %708
  %712 = vset.pattern.permute.xlu0 0
  %713 = vperm.xlu0 %712, %v621
  %v714 = vpop.permute.xlu0 %713
  %717 = vset.pattern.permute.xlu0 0
  %718 = vperm.xlu0 %717, %v635
  %v719 = vpop.permute.xlu0 %718
  %722 = vset.pattern.permute.xlu0 0
  %723 = vperm.xlu0 %722, %v649
  %v724 = vpop.permute.xlu0 %723
  %727 = vset.pattern.permute.xlu0 0
  %728 = vperm.xlu0 %727, %v663
  %v729 = vpop.permute.xlu0 %728
  %732 = vset.pattern.permute.xlu0 0
  %733 = vperm.xlu0 %732, %v677
  %v734 = vpop.permute.xlu0 %733
  %737 = vset.pattern.permute.xlu0 0
  %738 = vperm.xlu0 %737, %v691
  %v739 = vpop.permute.xlu0 %738
  %742 = vset.pattern.permute.xlu0 0
  %743 = vperm.xlu0 %742, %v705
  %v744 = vpop.permute.xlu0 %743
  %v746 = vmul.f32 %v480, %v709
  %v747 = vmul.f32 %v487, %v714
  %v748 = vmul.f32 %v494, %v719
  %v749 = vmul.f32 %v501, %v724
  %v750 = vmul.f32 %v508, %v729
  %v751 = vmul.f32 %v515, %v734
  %v752 = vmul.f32 %v522, %v739
  %v753 = vmul.f32 %v529, %v744
  %v762 = vsel %vm394, %v747, %v746
  %v763 = vsel %vm396, %v748, %v762
  %v764 = vsel %vm398, %v749, %v763
  %v765 = vsel %vm400, %v750, %v764
  %v766 = vsel %vm402, %v751, %v765
  %v767 = vsel %vm404, %v752, %v766
  %v768 = vsel %vm406, %v753, %v767
  %v770 = vsel %vm385, %v768, 0.0
  %v771 = vmul.f32 %v409, %v770
  %v772 = vsel %vm102, %v771, 0.0
  %773 = vadd.xlane.f32.xlu0 %v772
  %v774 = vpop.xlane.xlu0 %773
  %v775 = vmul.f32 %v409, %v409
  %v776 = vsel %vm102, %v775, 0.0
  %777 = vadd.xlane.f32.xlu0 %v776
  %v778 = vpop.xlane.xlu0 %777
  %v779 = vrsqrt.pop %v778
  %v780 = vmul.f32 %v779, %v778
  %v781 = vmul.f32 %v780, %v779
  %v782 = vmul.f32 0.5, %v781
  %v783 = vsub.f32 1.5, %v782
  %v784 = vmul.f32 %v779, %v783
  %v785 = vmul.f32 %v778, %v784
  %vm786 = vcmp.eq.f32.partialorder %v778, inf
  %v787 = vsel %vm786, %v778, %v785
  %vm788 = vcmp.eq.f32.partialorder %v778, 0.0
  %v789 = vand.u32 %v778, 2147483648
  %v790 = vsel %vm788, %v789, %v787
  %v791 = vmul.f32 %v770, %v770
  %v792 = vsel %vm102, %v791, 0.0
  %793 = vadd.xlane.f32.xlu0 %v792
  %v794 = vpop.xlane.xlu0 %793
  %v795 = vrsqrt.pop %v794
  %v796 = vmul.f32 %v795, %v794
  %v797 = vmul.f32 %v796, %v795
  %v798 = vmul.f32 0.5, %v797
  %v799 = vsub.f32 1.5, %v798
  %v800 = vmul.f32 %v795, %v799
  %v801 = vmul.f32 %v794, %v800
  %vm802 = vcmp.eq.f32.partialorder %v794, inf
  %v803 = vsel %vm802, %v794, %v801
  %vm804 = vcmp.eq.f32.partialorder %v794, 0.0
  %v805 = vand.u32 %v794, 2147483648
  %v806 = vsel %vm804, %v805, %v803
  %v807 = vmax.f32 %v790, 1e-08
  %v808 = vmax.f32 %v806, 1e-08
  %v809 = vmul.f32 %v807, %v808
  %v810 = vrcp.pop %v809
  %v811 = vmul.f32 %v809, %v810
  %v812 = vsub.f32 1.0, %v811
  %v813 = vmul.f32 %v810, %v812
  %v814 = vadd.f32 %v810, %v813
  %vm815 = vweird.f32 %v809
  %vm816 = vweird.f32 %v810
  %vm817 = vmor %vm815, %vm816
  %v818 = vsel %vm817, %v810, %v814
  %v819 = vand.u32 2147483647, %v809
  %vm820 = vcmp.eq.f32.partialorder %v819, 8.507059e+37
  %v821 = vand.u32 %v809, 2147483648
  %v822 = vor.u32 1.1754944e-38, %v821
  %v823 = vsel %vm820, %v822, %v818
  %v824 = vmul.f32 %v774, %v823
  %v825 = vld [vmem:[%s4] sm:$0xff]
  %v826 = vsub.f32 %v824, 1.0
  %v827 = vmul.f32 %v826, %v826
  %v828 = vmul.f32 %v825, %v827
  %v829 = vsub.f32 1.0, %v825
  %v830 = vsub.f32 %v824, -1.0
  %v831 = vmax.f32 %v830, 0.0
  %v832 = vmul.f32 %v831, %v831
  %v833 = vmul.f32 %v829, %v832
  %v834 = vadd.f32 %v828, %v833
  %v835 = vsel %vm37, %v834, 0.0
  %v836 = vadd.f32 %v835, 0.0
  %v837 = vsel %vm159, %v836, 0.0
  %v838 = vrot.slane %v837, 4
  %v839 = vadd.f32 %v837, %v838
  %v840 = vrot.slane %v839, 2
  %v841 = vadd.f32 %v839, %v840
  %v842 = vrot.slane %v841, 1
  %v843 = vadd.f32 %v841, %v842
  %v844 = vlaneseq
  %v845 = vand.u32 %v844, 127
  %vm846 = vcmp.lt.s32.totalorder %v845, 5
  %vm847 = vmand %vm385, %vm846
  %v848 = vld [vmem:[%s7] sm:$0xff]
  %v849 = vld [vmem:[%s7 + $0x8] sm:$0xff]
  %v850 = vld [vmem:[%s7 + $0x10] sm:$0xff]
  %v851 = vld [vmem:[%s7 + $0x18] sm:$0xff]
  %v852 = vld [vmem:[%s8] sm:$0x1]
  %v854 = vperm.slane %v852, 0
  %v857 = vsel %vm102, %v409, 0
  %859 = vmatpush.msra.mxu0 0.0
  %860 = vmatpush.msra.mxu0 0.0
  %861 = vmatpush.msra.mxu0 0.0
  %862 = vmatpush.msra.mxu0 0.0
  %863 = vmatpush.msra.mxu0 0.0
  %864 = vmatpush.msra.mxu0 0.0
  %865 = vmatpush.msra.mxu0 0.0
  %866 = vmatpush.msra.mxu0 0.0
  %867 = vmatpush.msra.mxu0 0.0
  %868 = vmatpush.msra.mxu0 0.0
  %869 = vmatpush.msra.mxu0 0.0
  %870 = vmatpush.msra.mxu0 0.0
  %871 = vmatpush.msra.mxu0 %v851
  %872 = vmatpush.msra.mxu0 %v850
  %873 = vmatpush.msra.mxu0 %v849
  %874 = vmatpush.msra.mxu0 %v848
  %875 = vmatmul.f32.gmra.mxu0 %v857
  %v876 = vpop.f32.mrf.mxu0
  %v877 = vadd.f32 %v854, %v876
  %878 = vdwg.mxu0
  %v879 = vld [vmem:[%s5] sm:$0xff]
  %v880 = vmax.f32 %v877, 0.0
  %v881 = vmul.f32 %v877, %v879
  %v882 = vsub.f32 %v880, %v881
  %v883 = vand.u32 2147483647, %v877
  %v884 = vsub.f32 0.0, %v883
  %v885 = vmul.f32 %v884, 1.442695
  %v886 = vpow.pop %v885
  %v887 = vadd.f32 %v886, 1.0
  %v888 = vlog2.pop %v887
  %v889 = vmul.f32 %v888, 0.6931472
  %v890 = vadd.f32 %v882, %v889
  %v891 = vsel %vm847, %v890, 0.0
  %892 = vadd.xlane.f32.xlu0 %v891
  %v893 = vpop.xlane.xlu0 %892
  %v894 = vrot.slane %v893, 4
  %v895 = vadd.f32 %v893, %v894
  %v896 = vrot.slane %v895, 2
  %v897 = vadd.f32 %v895, %v896
  %v898 = vrot.slane %v897, 1
  %v899 = vadd.f32 %v897, %v898
  %v901 = vsel %vm102, %v770, 0
  %903 = vmatpush.msra.mxu0 0.0
  %904 = vmatpush.msra.mxu0 0.0
  %905 = vmatpush.msra.mxu0 0.0
  %906 = vmatpush.msra.mxu0 0.0
  %907 = vmatpush.msra.mxu0 0.0
  %908 = vmatpush.msra.mxu0 0.0
  %909 = vmatpush.msra.mxu0 0.0
  %910 = vmatpush.msra.mxu0 0.0
  %911 = vmatpush.msra.mxu0 0.0
  %912 = vmatpush.msra.mxu0 0.0
  %913 = vmatpush.msra.mxu0 0.0
  %914 = vmatpush.msra.mxu0 0.0
  %915 = vmatpush.msra.mxu0 %v851
  %916 = vmatpush.msra.mxu0 %v850
  %917 = vmatpush.msra.mxu0 %v849
  %918 = vmatpush.msra.mxu0 %v848
  %919 = vmatmul.f32.gmra.mxu0 %v901
  %v920 = vpop.f32.mrf.mxu0
  %v921 = vadd.f32 %v854, %v920
  %922 = vdwg.mxu0
  %v923 = vld [vmem:[%s6] sm:$0xff]
  %v924 = vmax.f32 %v921, 0.0
  %v925 = vmul.f32 %v921, %v923
  %v926 = vsub.f32 %v924, %v925
  %v927 = vand.u32 2147483647, %v921
  %v928 = vsub.f32 0.0, %v927
  %v929 = vmul.f32 %v928, 1.442695
  %v930 = vpow.pop %v929
  %v931 = vadd.f32 %v930, 1.0
  %v932 = vlog2.pop %v931
  %v933 = vmul.f32 %v932, 0.6931472
  %v934 = vadd.f32 %v926, %v933
  %v935 = vsel %vm847, %v934, 0.0
  %936 = vadd.xlane.f32.xlu0 %v935
  %v937 = vpop.xlane.xlu0 %936
  %v938 = vrot.slane %v937, 4
  %v939 = vadd.f32 %v937, %v938
  %v940 = vrot.slane %v939, 2
  %v941 = vadd.f32 %v939, %v940
  %v942 = vrot.slane %v941, 1
  %v943 = vadd.f32 %v941, %v942
  %vm944 = vcmp.eq.s32.totalorder %v33, 0
  %vm945 = vcmp.eq.s32.totalorder %v845, 0
  %vm946 = vmand %vm944, %vm945
  %948 = vset.pattern.permute.xlu0 0
  %949 = vperm.xlu0 %948, %v843
  %v950 = vpop.permute.xlu0 %949
  %v952 = vsel %vm946, %v950, 0.0
  %vm953 = vcmp.eq.s32.totalorder %v845, 1
  %vm954 = vmand %vm944, %vm953
  %v955 = vsel %vm954, %v899, 0.0
  %v956 = vadd.f32 %v952, %v955
  %vm957 = vcmp.eq.s32.totalorder %v845, 2
  %vm958 = vmand %vm944, %vm957
  %v959 = vsel %vm958, %v943, 0.0
  %v960 = vadd.f32 %v956, %v959
  %961 = vst [vmem:[%s9] sm:$0xff] %v960
  // Predicated region
  $region38: #{joint_forward.1} parent=0 // pred_check
    _
  $region39: #{joint_forward.1} parent=0 // pred_check_branch
    %963 = sbr.rel (0) target = $region41
  $region40: #{joint_forward.1} parent=0 // pred_region
    _
  $region41: #{joint_forward.1} parent=0 // pred_fallthru
    _
  // Predicated region
  $region42: #{joint_forward.1} parent=0 // pred_check
    _
  $region43: #{joint_forward.1} parent=0 // pred_check_branch
    %965 = sbr.rel (0) target = $region45
  $region44: #{joint_forward.1} parent=0 // pred_region
    _
  $region45: #{joint_forward.1} parent=0 // pred_fallthru
    _

</llo_original>
